<compile_context>
chip_gen: v6e
topology: v6e:2x2x1
jax: 0.10.0
libtpu: 0.0.40
codegen_flags: <defaults>
</compile_context>

<pallas_src>
import functools

import jax
import jax.numpy as jnp
from jax.experimental import pallas as pl
from jax.experimental.pallas import tpu as pltpu


def _round_up(x, m):
    return (x + m - 1) // m * m


def _critic_kernel(s_ref, a_ref, g_ref,
                   w0s_ref, w0a_ref, w0g_ref, b0_ref,
                   w1_ref, b1_ref, w2_ref, b2_ref,
                   o_ref):
    # Layer 0: fused "concat" -> three partial matmuls into one f32 accumulator.
    h = jnp.dot(s_ref[...], w0s_ref[...], preferred_element_type=jnp.float32)
    h += jnp.dot(a_ref[...], w0a_ref[...], preferred_element_type=jnp.float32)
    h += jnp.dot(g_ref[...], w0g_ref[...], preferred_element_type=jnp.float32)
    h = jnp.maximum(h + b0_ref[...].astype(jnp.float32), 0.0)

    # Layer 1 (cast activations to the weight dtype so bf16 weights hit the bf16 MXU path).
    h = jnp.dot(h.astype(w1_ref.dtype), w1_ref[...], preferred_element_type=jnp.float32)
    h = jnp.maximum(h + b1_ref[...].astype(jnp.float32), 0.0)

    # Layer 2 (scalar head).
    out = jnp.dot(h.astype(w2_ref.dtype), w2_ref[...], preferred_element_type=jnp.float32)
    out = out + b2_ref[...].astype(jnp.float32)
    o_ref[...] = out.astype(o_ref.dtype)


def critic_forward(state, action, goal, params, *, batch_tile=512):
    """Pallas-fused Critic forward.

    state, goal: [B, state_dim]; action: [B, action_dim]; returns f32 [B, 1].
    Weights are stored [in_features, out_features] (transpose of PyTorch),
    biases as [1, out_features]. Any floating dtype (f32 or bf16) for inputs /
    params is accepted; accumulation is always f32.
    """
    B, state_dim = state.shape
    action_dim = action.shape[1]
    (w0, b0), (w1, b1), (w2, b2) = params
    H0 = w0.shape[1]
    H1 = w1.shape[1]
    assert w0.shape[0] == 2 * state_dim + action_dim

    # Split layer-0 weight so the [s|a|g] concat never materializes in HBM.
    w0_s = w0[:state_dim]
    w0_a = w0[state_dim:state_dim + action_dim]
    w0_g = w0[state_dim + action_dim:]

    # Choose a batch tile (multiple of 8) and pad the batch so the grid divides evenly.
    tb = min(batch_tile, _round_up(B, 8))
    Bp = _round_up(B, tb)
    if Bp != B:
        pad = ((0, Bp - B), (0, 0))
        state = jnp.pad(state, pad)
        action = jnp.pad(action, pad)
        goal = jnp.pad(goal, pad)

    grid = (Bp // tb,)

    def full(arr):
        return pl.BlockSpec(arr.shape, lambda i: (0,) * arr.ndim)

    def batched(d):
        return pl.BlockSpec((tb, d), lambda i: (i, 0))

    out = pl.pallas_call(
        _critic_kernel,
        out_shape=jax.ShapeDtypeStruct((Bp, 1), jnp.float32),
        grid_spec=pltpu.PrefetchScalarGridSpec(
            num_scalar_prefetch=0,
            grid=grid,
            in_specs=[
                batched(state_dim),   # state
                batched(action_dim),  # action
                batched(state_dim),   # goal
                full(w0_s), full(w0_a), full(w0_g), full(b0),
                full(w1), full(b1),
                full(w2), full(b2),
            ],
            out_specs=pl.BlockSpec((tb, 1), lambda i: (i, 0)),
        ),
        compiler_params=pltpu.CompilerParams(
            dimension_semantics=("parallel",),  # batch tiles shard across v7x's 2 TCs
        ),
    )(state, action, goal, w0_s, w0_a, w0_g, b0, w1, b1, w2, b2)

    return out[:B]


def init_critic_params(key, state_dim, action_dim, hidden_dims=(256, 256),
                       dtype=jnp.float32):
    """Init mimicking PyTorch nn.Linear default: U(-1/sqrt(fan_in), +1/sqrt(fan_in))."""
    dims = [2 * state_dim + action_dim] + list(hidden_dims) + [1]
    params = []
    for d_in, d_out in zip(dims[:-1], dims[1:]):
        key, kw, kb = jax.random.split(key, 3)
        bound = 1.0 / jnp.sqrt(float(d_in))
        w = jax.random.uniform(kw, (d_in, d_out), jnp.float32, -bound, bound)
        b = jax.random.uniform(kb, (1, d_out), jnp.float32, -bound, bound)
        params.append((w.astype(dtype), b.astype(dtype)))
    return params


def critic_reference(state, action, goal, params):
    """Pure-JAX f32 reference (highest-precision matmuls)."""
    x = jnp.concatenate([state, action, goal], axis=-1).astype(jnp.float32)
    (w0, b0), (w1, b1), (w2, b2) = params
    dot = functools.partial(jnp.dot, precision=jax.lax.Precision.HIGHEST)
    h = jnp.maximum(dot(x, w0.astype(jnp.float32)) + b0.astype(jnp.float32), 0.0)
    h = jnp.maximum(dot(h, w1.astype(jnp.float32)) + b1.astype(jnp.float32), 0.0)
    return dot(h, w2.astype(jnp.float32)) + b2.astype(jnp.float32)


if __name__ == "__main__":
    key = jax.random.PRNGKey(0)
    batch, state_dim, action_dim = 200, 16, 8      # non-multiple-of-8-tile batch on purpose
    hidden_dims = (256, 256)                       # PyTorch module default

    kp, ks, ka, kg = jax.random.split(key, 4)
    params = init_critic_params(kp, state_dim, action_dim, hidden_dims)
    state = jax.random.normal(ks, (batch, state_dim), jnp.float32)
    action = jax.random.normal(ka, (batch, action_dim), jnp.float32)
    goal = jax.random.normal(kg, (batch, state_dim), jnp.float32)

    ref = critic_reference(state, action, goal, params)

    # f32 path: small batch_tile forces a multi-step padded grid (exercises padding
    # + multi-step "parallel" grid that keeps both v7x TensorCores busy).
    out_f32 = jax.block_until_ready(
        critic_forward(state, action, goal, params, batch_tile=64))
    assert out_f32.shape == (batch, 1)
    assert jnp.allclose(out_f32, ref, atol=5e-4, rtol=5e-4), "f32 mismatch vs reference"

    # bf16 weights/activations, f32 accumulation (the recommended perf configuration).
    params_bf16 = [(w.astype(jnp.bfloat16), b.astype(jnp.bfloat16)) for (w, b) in params]
    out_bf16 = jax.block_until_ready(
        critic_forward(state.astype(jnp.bfloat16),
                       action.astype(jnp.bfloat16),
                       goal.astype(jnp.bfloat16),
                       params_bf16))  # default batch_tile=512
    assert out_bf16.shape == (batch, 1)
    assert jnp.allclose(out_bf16, ref, atol=5e-2, rtol=5e-2), "bf16 mismatch vs reference"

    print("KERNEL_OK")
</pallas_src>

<mosaic_0001>
module attributes {stable_mosaic.version = 11 : i64} {
  func.func @_critic_kernel(%arg0: i32, %arg1: memref<64x16xf32, #tpu.memory_space<vmem>>, %arg2: memref<64x8xf32, #tpu.memory_space<vmem>>, %arg3: memref<64x16xf32, #tpu.memory_space<vmem>>, %arg4: memref<16x256xf32, #tpu.memory_space<vmem>>, %arg5: memref<8x256xf32, #tpu.memory_space<vmem>>, %arg6: memref<16x256xf32, #tpu.memory_space<vmem>>, %arg7: memref<1x256xf32, #tpu.memory_space<vmem>>, %arg8: memref<256x256xf32, #tpu.memory_space<vmem>>, %arg9: memref<1x256xf32, #tpu.memory_space<vmem>>, %arg10: memref<256x1xf32, #tpu.memory_space<vmem>>, %arg11: memref<1x1xf32, #tpu.memory_space<vmem>>, %arg12: memref<64x1xf32, #tpu.memory_space<vmem>>) attributes {dimension_semantics = [#tpu.dimension_semantics<parallel>], iteration_bounds = array<i64: 4>, scalar_prefetch = 0 : i64, scratch_operands = 0 : i64, tpu.core_type = #tpu.core_type<tc>, window_params = [{transform_indices = @transform_0, window_bounds = array<i64: 64, 16>}, {transform_indices = @transform_1, window_bounds = array<i64: 64, 8>}, {transform_indices = @transform_2, window_bounds = array<i64: 64, 16>}, {pipeline_mode = #tpu.pipeline_mode<synchronous>, transform_indices = @transform_3, window_bounds = array<i64: 16, 256>}, {pipeline_mode = #tpu.pipeline_mode<synchronous>, transform_indices = @transform_4, window_bounds = array<i64: 8, 256>}, {pipeline_mode = #tpu.pipeline_mode<synchronous>, transform_indices = @transform_5, window_bounds = array<i64: 16, 256>}, {pipeline_mode = #tpu.pipeline_mode<synchronous>, transform_indices = @transform_6, window_bounds = array<i64: 1, 256>}, {pipeline_mode = #tpu.pipeline_mode<synchronous>, transform_indices = @transform_7, window_bounds = array<i64: 256, 256>}, {pipeline_mode = #tpu.pipeline_mode<synchronous>, transform_indices = @transform_8, window_bounds = array<i64: 1, 256>}, {pipeline_mode = #tpu.pipeline_mode<synchronous>, transform_indices = @transform_9, window_bounds = array<i64: 256, 1>}, {pipeline_mode = #tpu.pipeline_mode<synchronous>, transform_indices = @transform_10, window_bounds = array<i64: 1, 1>}, {transform_indices = @transform_11, window_bounds = array<i64: 64, 1>}]} {
    %c0 = arith.constant 0 : index
    %c0_0 = arith.constant 0 : index
    %0 = vector.load %arg1[%c0, %c0_0] : memref<64x16xf32, #tpu.memory_space<vmem>>, vector<64x16xf32>
    %c0_1 = arith.constant 0 : index
    %c0_2 = arith.constant 0 : index
    %1 = vector.load %arg4[%c0_1, %c0_2] : memref<16x256xf32, #tpu.memory_space<vmem>>, vector<16x256xf32>
    %cst = arith.constant dense<0.000000e+00> : vector<64x256xf32>
    %2 = tpu.matmul %0, %1, %cst {dimension_numbers = #tpu.dot_dimension_numbers<[1], [0], [0], [1], [0, 0, 1, 1], [], []>} : vector<64x16xf32>, vector<16x256xf32>, vector<64x256xf32> -> vector<64x256xf32>
    %c0_3 = arith.constant 0 : index
    %c0_4 = arith.constant 0 : index
    %3 = vector.load %arg2[%c0_3, %c0_4] : memref<64x8xf32, #tpu.memory_space<vmem>>, vector<64x8xf32>
    %c0_5 = arith.constant 0 : index
    %c0_6 = arith.constant 0 : index
    %4 = vector.load %arg5[%c0_5, %c0_6] : memref<8x256xf32, #tpu.memory_space<vmem>>, vector<8x256xf32>
    %cst_7 = arith.constant dense<0.000000e+00> : vector<64x256xf32>
    %5 = tpu.matmul %3, %4, %cst_7 {dimension_numbers = #tpu.dot_dimension_numbers<[1], [0], [0], [1], [0, 0, 1, 1], [], []>} : vector<64x8xf32>, vector<8x256xf32>, vector<64x256xf32> -> vector<64x256xf32>
    %6 = arith.addf %2, %5 : vector<64x256xf32>
    %c0_8 = arith.constant 0 : index
    %c0_9 = arith.constant 0 : index
    %7 = vector.load %arg3[%c0_8, %c0_9] : memref<64x16xf32, #tpu.memory_space<vmem>>, vector<64x16xf32>
    %c0_10 = arith.constant 0 : index
    %c0_11 = arith.constant 0 : index
    %8 = vector.load %arg6[%c0_10, %c0_11] : memref<16x256xf32, #tpu.memory_space<vmem>>, vector<16x256xf32>
    %cst_12 = arith.constant dense<0.000000e+00> : vector<64x256xf32>
    %9 = tpu.matmul %7, %8, %cst_12 {dimension_numbers = #tpu.dot_dimension_numbers<[1], [0], [0], [1], [0, 0, 1, 1], [], []>} : vector<64x16xf32>, vector<16x256xf32>, vector<64x256xf32> -> vector<64x256xf32>
    %10 = arith.addf %6, %9 : vector<64x256xf32>
    %c0_13 = arith.constant 0 : index
    %c0_14 = arith.constant 0 : index
    %11 = vector.load %arg7[%c0_13, %c0_14] : memref<1x256xf32, #tpu.memory_space<vmem>>, vector<1x256xf32>
    %12 = vector.broadcast %11 : vector<1x256xf32> to vector<64x256xf32>
    %13 = arith.addf %10, %12 : vector<64x256xf32>
    %cst_15 = arith.constant 0.000000e+00 : f32
    %14 = vector.broadcast %cst_15 : f32 to vector<64x256xf32>
    %15 = arith.maximumf %13, %14 : vector<64x256xf32>
    %c0_16 = arith.constant 0 : index
    %c0_17 = arith.constant 0 : index
    %16 = vector.load %arg8[%c0_16, %c0_17] : memref<256x256xf32, #tpu.memory_space<vmem>>, vector<256x256xf32>
    %cst_18 = arith.constant dense<0.000000e+00> : vector<64x256xf32>
    %17 = tpu.matmul %15, %16, %cst_18 {dimension_numbers = #tpu.dot_dimension_numbers<[1], [0], [0], [1], [0, 0, 1, 1], [], []>} : vector<64x256xf32>, vector<256x256xf32>, vector<64x256xf32> -> vector<64x256xf32>
    %c0_19 = arith.constant 0 : index
    %c0_20 = arith.constant 0 : index
    %18 = vector.load %arg9[%c0_19, %c0_20] : memref<1x256xf32, #tpu.memory_space<vmem>>, vector<1x256xf32>
    %19 = vector.broadcast %18 : vector<1x256xf32> to vector<64x256xf32>
    %20 = arith.addf %17, %19 : vector<64x256xf32>
    %cst_21 = arith.constant 0.000000e+00 : f32
    %21 = vector.broadcast %cst_21 : f32 to vector<64x256xf32>
    %22 = arith.maximumf %20, %21 : vector<64x256xf32>
    %c0_22 = arith.constant 0 : index
    %c0_23 = arith.constant 0 : index
    %23 = vector.load %arg10[%c0_22, %c0_23] : memref<256x1xf32, #tpu.memory_space<vmem>>, vector<256x1xf32>
    %cst_24 = arith.constant dense<0.000000e+00> : vector<64x1xf32>
    %24 = tpu.matmul %22, %23, %cst_24 {dimension_numbers = #tpu.dot_dimension_numbers<[1], [0], [0], [1], [0, 0, 1, 1], [], []>} : vector<64x256xf32>, vector<256x1xf32>, vector<64x1xf32> -> vector<64x1xf32>
    %c0_25 = arith.constant 0 : index
    %c0_26 = arith.constant 0 : index
    %25 = vector.load %arg11[%c0_25, %c0_26] : memref<1x1xf32, #tpu.memory_space<vmem>>, vector<1x1xf32>
    %26 = vector.broadcast %25 : vector<1x1xf32> to vector<64x1xf32>
    %27 = arith.addf %24, %26 : vector<64x1xf32>
    %c0_27 = arith.constant 0 : index
    %c0_28 = arith.constant 0 : index
    %28 = vector.load %arg12[%c0_27, %c0_28] : memref<64x1xf32, #tpu.memory_space<vmem>>, vector<64x1xf32>
    tpu.vector_store %arg12[%c0_27, %c0_28], %27 {strides = array<i32>} : memref<64x1xf32, #tpu.memory_space<vmem>>, vector<64x1xf32>,
    return
  }
  func.func @transform_0(%arg0: i32) -> (i32, i32) {
    %c0_i32 = arith.constant 0 : i32
    %c0_i32_0 = arith.constant 0 : i32
    return %arg0, %c0_i32 : i32, i32
  }
  func.func @transform_1(%arg0: i32) -> (i32, i32) {
    %c0_i32 = arith.constant 0 : i32
    %c0_i32_0 = arith.constant 0 : i32
    return %arg0, %c0_i32 : i32, i32
  }
  func.func @transform_2(%arg0: i32) -> (i32, i32) {
    %c0_i32 = arith.constant 0 : i32
    %c0_i32_0 = arith.constant 0 : i32
    return %arg0, %c0_i32 : i32, i32
  }
  func.func @transform_3(%arg0: i32) -> (i32, i32) {
    %c0_i32 = arith.constant 0 : i32
    %c0_i32_0 = arith.constant 0 : i32
    %c0_i32_1 = arith.constant 0 : i32
    return %c0_i32, %c0_i32_0 : i32, i32
  }
  func.func @transform_4(%arg0: i32) -> (i32, i32) {
    %c0_i32 = arith.constant 0 : i32
    %c0_i32_0 = arith.constant 0 : i32
    %c0_i32_1 = arith.constant 0 : i32
    return %c0_i32, %c0_i32_0 : i32, i32
  }
  func.func @transform_5(%arg0: i32) -> (i32, i32) {
    %c0_i32 = arith.constant 0 : i32
    %c0_i32_0 = arith.constant 0 : i32
    %c0_i32_1 = arith.constant 0 : i32
    return %c0_i32, %c0_i32_0 : i32, i32
  }
  func.func @transform_6(%arg0: i32) -> (i32, i32) {
    %c0_i32 = arith.constant 0 : i32
    %c0_i32_0 = arith.constant 0 : i32
    %c0_i32_1 = arith.constant 0 : i32
    return %c0_i32, %c0_i32_0 : i32, i32
  }
  func.func @transform_7(%arg0: i32) -> (i32, i32) {
    %c0_i32 = arith.constant 0 : i32
    %c0_i32_0 = arith.constant 0 : i32
    %c0_i32_1 = arith.constant 0 : i32
    return %c0_i32, %c0_i32_0 : i32, i32
  }
  func.func @transform_8(%arg0: i32) -> (i32, i32) {
    %c0_i32 = arith.constant 0 : i32
    %c0_i32_0 = arith.constant 0 : i32
    %c0_i32_1 = arith.constant 0 : i32
    return %c0_i32, %c0_i32_0 : i32, i32
  }
  func.func @transform_9(%arg0: i32) -> (i32, i32) {
    %c0_i32 = arith.constant 0 : i32
    %c0_i32_0 = arith.constant 0 : i32
    %c0_i32_1 = arith.constant 0 : i32
    return %c0_i32, %c0_i32_0 : i32, i32
  }
  func.func @transform_10(%arg0: i32) -> (i32, i32) {
    %c0_i32 = arith.constant 0 : i32
    %c0_i32_0 = arith.constant 0 : i32
    %c0_i32_1 = arith.constant 0 : i32
    return %c0_i32, %c0_i32_0 : i32, i32
  }
  func.func @transform_11(%arg0: i32) -> (i32, i32) {
    %c0_i32 = arith.constant 0 : i32
    %c0_i32_0 = arith.constant 0 : i32
    return %arg0, %c0_i32 : i32, i32
  }
}

</mosaic_0001>

<llo_original>
// kernel: tpu_custom_call.1
$region0: #{tpu_custom_call.1}
  #allocation0 [shape = 'u32[]', space=smem, size = 0x4, offset = 0x4, fixed_abs, tag = 'smem constant byte address 0x4 - core index']
  #allocation1 [shape = 'u32[144,128]{1,0:T(1,128)}', space=vmem, size = 0x12000, scoped, tag = 'internal scratch']
  #allocation2 [shape = 'f32[1,1]{1,0:T(1,128)S(1)}', space=vmem, size = 0x200, scoped, tag = 'scoped memory for tpu_custom_call.1']
  %s0 = inlined_call_operand.vmem [shape: f32[256,16], index: 0, kind: input, shape index: {}]
  %s1 = inlined_call_operand.vmem [shape: f32[256,8], index: 1, kind: input, shape index: {}]
  %s2 = inlined_call_operand.vmem [shape: f32[256,16], index: 2, kind: input, shape index: {}]
  %s3 = inlined_call_operand.vmem [shape: f32[16,256], index: 3, kind: input, shape index: {}]
  %s4 = inlined_call_operand.vmem [shape: f32[8,256], index: 4, kind: input, shape index: {}]
  %s5 = inlined_call_operand.vmem [shape: f32[16,256], index: 5, kind: input, shape index: {}]
  %s6 = inlined_call_operand.vmem [shape: f32[1,256], index: 6, kind: input, shape index: {}]
  %s7 = inlined_call_operand.vmem [shape: f32[256,256], index: 7, kind: input, shape index: {}]
  %s8 = inlined_call_operand.vmem [shape: f32[1,256], index: 8, kind: input, shape index: {}]
  %s9 = inlined_call_operand.vmem [shape: f32[256,1], index: 9, kind: input, shape index: {}]
  %s10 = inlined_call_operand.<no memory space> [shape: f32[1,1], index: 10, kind: input, shape index: {}]
  %s11 = inlined_call_operand.vmem [shape: f32[256,1], index: 11, kind: output, shape index: {}]
  %s12 = sld [smem:[#allocation0]]
  $region77: #{tpu_custom_call.1} parent=0
    _
  %s14 = ssub.s32 1, %s12
  %s15 = scalar_select 0, %s14, %s12
  %v16 = vstv %s10
  %17 = vst [vmem:[#allocation2] sm:$0x1] %v16
  loop: start=0, step=1, limit=6
  $region2: #{tpu_custom_call.1} parent=0 // loop_pre_header
    _
  $region3: #{tpu_custom_call.1} parent=0 // loop_header
    %s19 = sphi 0, %s23
    %p20 = scmp.ge.s32.totalorder %s19, 6
    %s29 = sphi 0, %s31
    %s32 = sphi 0, %s29
    %s33 = sphi 0, %s32
    %s49 = sphi 0, %s33
    %s55 = sphi 0, %s57
    %s58 = sphi 0, %s55
    %s59 = sphi 0, %s58
    %s75 = sphi 0, %s59
    %s81 = sphi 0, %s83
    %s84 = sphi 0, %s81
    %s85 = sphi 0, %s84
    %s101 = sphi 0, %s85
    %s105 = sphi 0, %s105
    %s107 = sphi 0, %s105
    %s108 = sphi 0, %s107
    %s122 = sphi 0, %s108
    %s126 = sphi 0, %s126
    %s128 = sphi 0, %s126
    %s129 = sphi 0, %s128
    %s143 = sphi 0, %s129
    %s147 = sphi 0, %s147
    %s149 = sphi 0, %s147
    %s150 = sphi 0, %s149
    %s164 = sphi 0, %s150
    %s168 = sphi 0, %s168
    %s170 = sphi 0, %s168
    %s171 = sphi 0, %s170
    %s185 = sphi 0, %s171
    %s189 = sphi 0, %s189
    %s191 = sphi 0, %s189
    %s192 = sphi 0, %s191
    %s206 = sphi 0, %s192
    %s210 = sphi 0, %s210
    %s212 = sphi 0, %s210
    %s213 = sphi 0, %s212
    %s227 = sphi 0, %s213
    %s231 = sphi 0, %s231
    %s233 = sphi 0, %s231
    %s234 = sphi 0, %s233
    %s248 = sphi 0, %s234
    %s252 = sphi 0, %s252
    %s254 = sphi 0, %s252
    %s255 = sphi 0, %s254
    %s269 = sphi 0, %s255
    %s275 = sphi 0, %s277
    %s278 = sphi 0, %s275
    %s279 = sphi 0, %s278
    %s295 = sphi 0, %s279
  $region4: #{tpu_custom_call.1} parent=0 // loop_header_branch
    %22 = sbr.rel (%p20) target = $region8
  $region5: #{tpu_custom_call.1} parent=0 // loop_body
    %s24 = ssub.s32 %s19, 1
    %s25 = ssub.s32 %s19, 2
    %s26 = sadd.s32 %s19, 1
    %s27 = ssub.s32 %s19, %s26
    %p28 = scmp.eq.s32.totalorder %s27, 0
    %s30 = sadd.s32 %s29, 1
    %s31 = scalar_select %p28, %s29, %s30
    %p34 = pneg %p28
    %p35 = scmp.eq.s32.totalorder %s19, 3
    %p36 = por %p34, %p35
    %p37 = scmp.ne.s32.totalorder %s29, %s32
    %p38 = scmp.eq.s32.totalorder %s19, 0
    %p39 = por %p37, %p38
    %p40 = scmp.ne.s32.totalorder %s29, %s32
    %p41 = scmp.eq.s32.totalorder %s24, 3
    %p42 = por %p40, %p41
    %p43 = scmp.ne.s32.totalorder %s32, %s33
    %p44 = scmp.eq.s32.totalorder %s24, 0
    %p45 = por %p43, %p44
    %p46 = scmp.ne.s32.totalorder %s32, %s33
    %p47 = scmp.eq.s32.totalorder %s25, 3
    %p48 = por %p46, %p47
    %p50 = scmp.ne.s32.totalorder %s33, %s49
    %p51 = scmp.eq.s32.totalorder %s25, 0
    %p52 = por %p50, %p51
    %s53 = ssub.s32 %s19, %s26
    %p54 = scmp.eq.s32.totalorder %s53, 0
    %s56 = sadd.s32 %s55, 1
    %s57 = scalar_select %p54, %s55, %s56
    %p60 = pneg %p54
    %p61 = scmp.eq.s32.totalorder %s19, 3
    %p62 = por %p60, %p61
    %p63 = scmp.ne.s32.totalorder %s55, %s58
    %p64 = scmp.eq.s32.totalorder %s19, 0
    %p65 = por %p63, %p64
    %p66 = scmp.ne.s32.totalorder %s55, %s58
    %p67 = scmp.eq.s32.totalorder %s24, 3
    %p68 = por %p66, %p67
    %p69 = scmp.ne.s32.totalorder %s58, %s59
    %p70 = scmp.eq.s32.totalorder %s24, 0
    %p71 = por %p69, %p70
    %p72 = scmp.ne.s32.totalorder %s58, %s59
    %p73 = scmp.eq.s32.totalorder %s25, 3
    %p74 = por %p72, %p73
    %p76 = scmp.ne.s32.totalorder %s59, %s75
    %p77 = scmp.eq.s32.totalorder %s25, 0
    %p78 = por %p76, %p77
    %s79 = ssub.s32 %s19, %s26
    %p80 = scmp.eq.s32.totalorder %s79, 0
    %s82 = sadd.s32 %s81, 1
    %s83 = scalar_select %p80, %s81, %s82
    %p86 = pneg %p80
    %p87 = scmp.eq.s32.totalorder %s19, 3
    %p88 = por %p86, %p87
    %p89 = scmp.ne.s32.totalorder %s81, %s84
    %p90 = scmp.eq.s32.totalorder %s19, 0
    %p91 = por %p89, %p90
    %p92 = scmp.ne.s32.totalorder %s81, %s84
    %p93 = scmp.eq.s32.totalorder %s24, 3
    %p94 = por %p92, %p93
    %p95 = scmp.ne.s32.totalorder %s84, %s85
    %p96 = scmp.eq.s32.totalorder %s24, 0
    %p97 = por %p95, %p96
    %p98 = scmp.ne.s32.totalorder %s84, %s85
    %p99 = scmp.eq.s32.totalorder %s25, 3
    %p100 = por %p98, %p99
    %p102 = scmp.ne.s32.totalorder %s85, %s101
    %p103 = scmp.eq.s32.totalorder %s25, 0
    %p104 = por %p102, %p103
    %s106 = sadd.s32 %s105, 1
    %p109 = scmp.eq.s32.totalorder %s19, 3
    %p110 = scmp.ne.s32.totalorder %s105, %s107
    %p111 = scmp.eq.s32.totalorder %s19, 0
    %p112 = por %p110, %p111
    %p113 = scmp.ne.s32.totalorder %s105, %s107
    %p114 = scmp.eq.s32.totalorder %s24, 3
    %p115 = por %p113, %p114
    %p116 = scmp.ne.s32.totalorder %s107, %s108
    %p117 = scmp.eq.s32.totalorder %s24, 0
    %p118 = por %p116, %p117
    %p119 = scmp.ne.s32.totalorder %s107, %s108
    %p120 = scmp.eq.s32.totalorder %s25, 3
    %p121 = por %p119, %p120
    %p123 = scmp.ne.s32.totalorder %s108, %s122
    %p124 = scmp.eq.s32.totalorder %s25, 0
    %p125 = por %p123, %p124
    %s127 = sadd.s32 %s126, 1
    %p130 = scmp.eq.s32.totalorder %s19, 3
    %p131 = scmp.ne.s32.totalorder %s126, %s128
    %p132 = scmp.eq.s32.totalorder %s19, 0
    %p133 = por %p131, %p132
    %p134 = scmp.ne.s32.totalorder %s126, %s128
    %p135 = scmp.eq.s32.totalorder %s24, 3
    %p136 = por %p134, %p135
    %p137 = scmp.ne.s32.totalorder %s128, %s129
    %p138 = scmp.eq.s32.totalorder %s24, 0
    %p139 = por %p137, %p138
    %p140 = scmp.ne.s32.totalorder %s128, %s129
    %p141 = scmp.eq.s32.totalorder %s25, 3
    %p142 = por %p140, %p141
    %p144 = scmp.ne.s32.totalorder %s129, %s143
    %p145 = scmp.eq.s32.totalorder %s25, 0
    %p146 = por %p144, %p145
    %s148 = sadd.s32 %s147, 1
    %p151 = scmp.eq.s32.totalorder %s19, 3
    %p152 = scmp.ne.s32.totalorder %s147, %s149
    %p153 = scmp.eq.s32.totalorder %s19, 0
    %p154 = por %p152, %p153
    %p155 = scmp.ne.s32.totalorder %s147, %s149
    %p156 = scmp.eq.s32.totalorder %s24, 3
    %p157 = por %p155, %p156
    %p158 = scmp.ne.s32.totalorder %s149, %s150
    %p159 = scmp.eq.s32.totalorder %s24, 0
    %p160 = por %p158, %p159
    %p161 = scmp.ne.s32.totalorder %s149, %s150
    %p162 = scmp.eq.s32.totalorder %s25, 3
    %p163 = por %p161, %p162
    %p165 = scmp.ne.s32.totalorder %s150, %s164
    %p166 = scmp.eq.s32.totalorder %s25, 0
    %p167 = por %p165, %p166
    %s169 = sadd.s32 %s168, 1
    %p172 = scmp.eq.s32.totalorder %s19, 3
    %p173 = scmp.ne.s32.totalorder %s168, %s170
    %p174 = scmp.eq.s32.totalorder %s19, 0
    %p175 = por %p173, %p174
    %p176 = scmp.ne.s32.totalorder %s168, %s170
    %p177 = scmp.eq.s32.totalorder %s24, 3
    %p178 = por %p176, %p177
    %p179 = scmp.ne.s32.totalorder %s170, %s171
    %p180 = scmp.eq.s32.totalorder %s24, 0
    %p181 = por %p179, %p180
    %p182 = scmp.ne.s32.totalorder %s170, %s171
    %p183 = scmp.eq.s32.totalorder %s25, 3
    %p184 = por %p182, %p183
    %p186 = scmp.ne.s32.totalorder %s171, %s185
    %p187 = scmp.eq.s32.totalorder %s25, 0
    %p188 = por %p186, %p187
    %s190 = sadd.s32 %s189, 1
    %p193 = scmp.eq.s32.totalorder %s19, 3
    %p194 = scmp.ne.s32.totalorder %s189, %s191
    %p195 = scmp.eq.s32.totalorder %s19, 0
    %p196 = por %p194, %p195
    %p197 = scmp.ne.s32.totalorder %s189, %s191
    %p198 = scmp.eq.s32.totalorder %s24, 3
    %p199 = por %p197, %p198
    %p200 = scmp.ne.s32.totalorder %s191, %s192
    %p201 = scmp.eq.s32.totalorder %s24, 0
    %p202 = por %p200, %p201
    %p203 = scmp.ne.s32.totalorder %s191, %s192
    %p204 = scmp.eq.s32.totalorder %s25, 3
    %p205 = por %p203, %p204
    %p207 = scmp.ne.s32.totalorder %s192, %s206
    %p208 = scmp.eq.s32.totalorder %s25, 0
    %p209 = por %p207, %p208
    %s211 = sadd.s32 %s210, 1
    %p214 = scmp.eq.s32.totalorder %s19, 3
    %p215 = scmp.ne.s32.totalorder %s210, %s212
    %p216 = scmp.eq.s32.totalorder %s19, 0
    %p217 = por %p215, %p216
    %p218 = scmp.ne.s32.totalorder %s210, %s212
    %p219 = scmp.eq.s32.totalorder %s24, 3
    %p220 = por %p218, %p219
    %p221 = scmp.ne.s32.totalorder %s212, %s213
    %p222 = scmp.eq.s32.totalorder %s24, 0
    %p223 = por %p221, %p222
    %p224 = scmp.ne.s32.totalorder %s212, %s213
    %p225 = scmp.eq.s32.totalorder %s25, 3
    %p226 = por %p224, %p225
    %p228 = scmp.ne.s32.totalorder %s213, %s227
    %p229 = scmp.eq.s32.totalorder %s25, 0
    %p230 = por %p228, %p229
    %s232 = sadd.s32 %s231, 1
    %p235 = scmp.eq.s32.totalorder %s19, 3
    %p236 = scmp.ne.s32.totalorder %s231, %s233
    %p237 = scmp.eq.s32.totalorder %s19, 0
    %p238 = por %p236, %p237
    %p239 = scmp.ne.s32.totalorder %s231, %s233
    %p240 = scmp.eq.s32.totalorder %s24, 3
    %p241 = por %p239, %p240
    %p242 = scmp.ne.s32.totalorder %s233, %s234
    %p243 = scmp.eq.s32.totalorder %s24, 0
    %p244 = por %p242, %p243
    %p245 = scmp.ne.s32.totalorder %s233, %s234
    %p246 = scmp.eq.s32.totalorder %s25, 3
    %p247 = por %p245, %p246
    %p249 = scmp.ne.s32.totalorder %s234, %s248
    %p250 = scmp.eq.s32.totalorder %s25, 0
    %p251 = por %p249, %p250
    %s253 = sadd.s32 %s252, 1
    %p256 = scmp.eq.s32.totalorder %s19, 3
    %p257 = scmp.ne.s32.totalorder %s252, %s254
    %p258 = scmp.eq.s32.totalorder %s19, 0
    %p259 = por %p257, %p258
    %p260 = scmp.ne.s32.totalorder %s252, %s254
    %p261 = scmp.eq.s32.totalorder %s24, 3
    %p262 = por %p260, %p261
    %p263 = scmp.ne.s32.totalorder %s254, %s255
    %p264 = scmp.eq.s32.totalorder %s24, 0
    %p265 = por %p263, %p264
    %p266 = scmp.ne.s32.totalorder %s254, %s255
    %p267 = scmp.eq.s32.totalorder %s25, 3
    %p268 = por %p266, %p267
    %p270 = scmp.ne.s32.totalorder %s255, %s269
    %p271 = scmp.eq.s32.totalorder %s25, 0
    %p272 = por %p270, %p271
    %s273 = ssub.s32 %s19, %s26
    %p274 = scmp.eq.s32.totalorder %s273, 0
    %s276 = sadd.s32 %s275, 1
    %s277 = scalar_select %p274, %s275, %s276
    %p280 = pneg %p274
    %p281 = scmp.eq.s32.totalorder %s19, 3
    %p282 = por %p280, %p281
    %p283 = scmp.ne.s32.totalorder %s275, %s278
    %p284 = scmp.eq.s32.totalorder %s19, 0
    %p285 = por %p283, %p284
    %p286 = scmp.ne.s32.totalorder %s275, %s278
    %p287 = scmp.eq.s32.totalorder %s24, 3
    %p288 = por %p286, %p287
    %p289 = scmp.ne.s32.totalorder %s278, %s279
    %p290 = scmp.eq.s32.totalorder %s24, 0
    %p291 = por %p289, %p290
    %p292 = scmp.ne.s32.totalorder %s278, %s279
    %p293 = scmp.eq.s32.totalorder %s25, 3
    %p294 = por %p292, %p293
    %p296 = scmp.ne.s32.totalorder %s279, %s295
    %p297 = scmp.eq.s32.totalorder %s25, 0
    %p298 = por %p296, %p297
    %p299 = scmp.le.s32.totalorder 1, %s19
    %p300 = scmp.lt.s32.totalorder %s19, 5
    %p301 = pnand %p299, %p300
    %p302 = pneg %p301
    // Predicated region
    $region9: #{tpu_custom_call.1} parent=5 // pred_check
      _
    $region10: #{tpu_custom_call.1} parent=5 // pred_check_branch
      %304 = sbr.rel (%p301) target = $region12
    $region11: #{tpu_custom_call.1} parent=5 // pred_region
      %s305 = ssub.s32 %s19, 1
      // Predicated region
      $region13: #{tpu_custom_call.1} parent=11 // pred_check
        %p306 = pneg %p118
      $region14: #{tpu_custom_call.1} parent=11 // pred_check_branch
        %308 = sbr.rel (%p306) target = $region16
      $region15: #{tpu_custom_call.1} parent=11 // pred_region
        _
      $region16: #{tpu_custom_call.1} parent=11 // pred_fallthru
        _
      // Predicated region
      $region17: #{tpu_custom_call.1} parent=11 // pred_check
        %p309 = pneg %p139
      $region18: #{tpu_custom_call.1} parent=11 // pred_check_branch
        %311 = sbr.rel (%p309) target = $region20
      $region19: #{tpu_custom_call.1} parent=11 // pred_region
        _
      $region20: #{tpu_custom_call.1} parent=11 // pred_fallthru
        _
      // Predicated region
      $region21: #{tpu_custom_call.1} parent=11 // pred_check
        %p312 = pneg %p160
      $region22: #{tpu_custom_call.1} parent=11 // pred_check_branch
        %314 = sbr.rel (%p312) target = $region24
      $region23: #{tpu_custom_call.1} parent=11 // pred_region
        _
      $region24: #{tpu_custom_call.1} parent=11 // pred_fallthru
        _
      // Predicated region
      $region25: #{tpu_custom_call.1} parent=11 // pred_check
        %p315 = pneg %p181
      $region26: #{tpu_custom_call.1} parent=11 // pred_check_branch
        %317 = sbr.rel (%p315) target = $region28
      $region27: #{tpu_custom_call.1} parent=11 // pred_region
        _
      $region28: #{tpu_custom_call.1} parent=11 // pred_fallthru
        _
      // Predicated region
      $region29: #{tpu_custom_call.1} parent=11 // pred_check
        %p318 = pneg %p202
      $region30: #{tpu_custom_call.1} parent=11 // pred_check_branch
        %320 = sbr.rel (%p318) target = $region32
      $region31: #{tpu_custom_call.1} parent=11 // pred_region
        _
      $region32: #{tpu_custom_call.1} parent=11 // pred_fallthru
        _
      // Predicated region
      $region33: #{tpu_custom_call.1} parent=11 // pred_check
        %p321 = pneg %p223
      $region34: #{tpu_custom_call.1} parent=11 // pred_check_branch
        %323 = sbr.rel (%p321) target = $region36
      $region35: #{tpu_custom_call.1} parent=11 // pred_region
        _
      $region36: #{tpu_custom_call.1} parent=11 // pred_fallthru
        _
      // Predicated region
      $region37: #{tpu_custom_call.1} parent=11 // pred_check
        %p324 = pneg %p244
      $region38: #{tpu_custom_call.1} parent=11 // pred_check_branch
        %326 = sbr.rel (%p324) target = $region40
      $region39: #{tpu_custom_call.1} parent=11 // pred_region
        _
      $region40: #{tpu_custom_call.1} parent=11 // pred_fallthru
        _
      // Predicated region
      $region41: #{tpu_custom_call.1} parent=11 // pred_check
        %p327 = pneg %p265
      $region42: #{tpu_custom_call.1} parent=11 // pred_check_branch
        %329 = sbr.rel (%p327) target = $region44
      $region43: #{tpu_custom_call.1} parent=11 // pred_region
        _
      $region44: #{tpu_custom_call.1} parent=11 // pred_fallthru
        _
    $region12: #{tpu_custom_call.1} parent=5 // pred_fallthru
      _
    %p330 = scmp.lt.s32.totalorder %s19, 4
    // Predicated region
    $region45: #{tpu_custom_call.1} parent=5 // pred_check
      %p331 = pneg %p330
    $region46: #{tpu_custom_call.1} parent=5 // pred_check_branch
      %333 = sbr.rel (%p331) target = $region48
    $region47: #{tpu_custom_call.1} parent=5 // pred_region
      // Predicated region
      $region49: #{tpu_custom_call.1} parent=47 // pred_check
        %p334 = pneg %p39
      $region50: #{tpu_custom_call.1} parent=47 // pred_check_branch
        %336 = sbr.rel (%p334) target = $region52
      $region51: #{tpu_custom_call.1} parent=47 // pred_region
        %s337 = smul.u32 8, %s19
        %p338 = scmp.lt.s32.totalorder %s337, 31
        %s339 = scalar_select %p338, %s337, 31
        %s340 = smul.addr %s339, 8
        %s341 = scalar_lea.vmem %s0, %s340
        %s342 = smul.u32 8, %s19
      $region52: #{tpu_custom_call.1} parent=47 // pred_fallthru
        _
      // Predicated region
      $region53: #{tpu_custom_call.1} parent=47 // pred_check
        %p343 = pneg %p65
      $region54: #{tpu_custom_call.1} parent=47 // pred_check_branch
        %345 = sbr.rel (%p343) target = $region56
      $region55: #{tpu_custom_call.1} parent=47 // pred_region
        %s346 = smul.u32 8, %s19
        %p347 = scmp.lt.s32.totalorder %s346, 31
        %s348 = scalar_select %p347, %s346, 31
        %s349 = smul.addr %s348, 8
        %s350 = scalar_lea.vmem %s1, %s349
        %s351 = smul.u32 8, %s19
      $region56: #{tpu_custom_call.1} parent=47 // pred_fallthru
        _
      // Predicated region
      $region57: #{tpu_custom_call.1} parent=47 // pred_check
        %p352 = pneg %p91
      $region58: #{tpu_custom_call.1} parent=47 // pred_check_branch
        %354 = sbr.rel (%p352) target = $region60
      $region59: #{tpu_custom_call.1} parent=47 // pred_region
        %s355 = smul.u32 8, %s19
        %p356 = scmp.lt.s32.totalorder %s355, 31
        %s357 = scalar_select %p356, %s355, 31
        %s358 = smul.addr %s357, 8
        %s359 = scalar_lea.vmem %s2, %s358
        %s360 = smul.u32 8, %s19
      $region60: #{tpu_custom_call.1} parent=47 // pred_fallthru
        _
    $region48: #{tpu_custom_call.1} parent=5 // pred_fallthru
      _
    %p361 = scmp.le.s32.totalorder 1, %s19
    %p362 = scmp.lt.s32.totalorder %s19, 5
    %p363 = pnand %p361, %p362
    %p364 = pneg %p363
    // Predicated region
    $region61: #{tpu_custom_call.1} parent=5 // pred_check
      _
    $region62: #{tpu_custom_call.1} parent=5 // pred_check_branch
      %366 = sbr.rel (%p363) target = $region64
    $region63: #{tpu_custom_call.1} parent=5 // pred_region
      %s367 = ssub.s32 %s19, 1
      %s368 = smul.u32 8, %s24
      %p369 = scmp.lt.s32.totalorder %s368, 31
      %s370 = scalar_select %p369, %s368, 31
      %s371 = smul.addr %s370, 8
      %s372 = scalar_lea.vmem %s0, %s371
      %p373 = pneg %p45
      %p374 = pneg %p42
      %s375 = smul.u32 8, %s24
      %p376 = scmp.lt.s32.totalorder %s375, 31
      %s377 = scalar_select %p376, %s375, 31
      %s378 = smul.addr %s377, 8
      %s379 = scalar_lea.vmem %s1, %s378
      %p380 = pneg %p71
      %p381 = pneg %p68
      %s382 = smul.u32 8, %s24
      %p383 = scmp.lt.s32.totalorder %s382, 31
      %s384 = scalar_select %p383, %s382, 31
      %s385 = smul.addr %s384, 8
      %s386 = scalar_lea.vmem %s2, %s385
      %p387 = pneg %p97
      %p388 = pneg %p94
      %p389 = pneg %p118
      %p390 = pneg %p115
      %p391 = pneg %p139
      %p392 = pneg %p136
      %p393 = pneg %p160
      %p394 = pneg %p157
      %p395 = pneg %p181
      %p396 = pneg %p178
      %p397 = pneg %p202
      %p398 = pneg %p199
      %p399 = pneg %p223
      %p400 = pneg %p220
      %p401 = pneg %p244
      %p402 = pneg %p241
      %p403 = pneg %p265
      %p404 = pneg %p262
      %p405 = pneg %p291
      %p406 = pneg %p288
      %s407 = smul.u32 8, %s24
      %p408 = scmp.lt.s32.totalorder %s407, 31
      %s409 = scalar_select %p408, %s407, 31
      %s410 = smul.addr %s409, 8
      %s411 = scalar_lea.vmem %s11, %s410
      %s412 = smul.u32 8, %s24
      %p413 = scmp.lt.s32.totalorder %s412, 31
      %s414 = scalar_select %p413, %s412, 31
      %s415 = smul.addr %s414, 8
      %s416 = scalar_lea.vmem %s0, %s415
      %s417 = smul.u32 8, %s24
      %s418 = smul.u32 8, %s24
      %p419 = scmp.lt.s32.totalorder %s418, 31
      %s420 = scalar_select %p419, %s418, 31
      %s421 = smul.addr %s420, 8
      %s422 = scalar_lea.vmem %s1, %s421
      %s423 = smul.u32 8, %s24
      %s424 = smul.u32 8, %s24
      %p425 = scmp.lt.s32.totalorder %s424, 31
      %s426 = scalar_select %p425, %s424, 31
      %s427 = smul.addr %s426, 8
      %s428 = scalar_lea.vmem %s2, %s427
      %s429 = smul.u32 8, %s24
      %s430 = smul.u32 8, %s24
      %p431 = scmp.lt.s32.totalorder %s430, 31
      %s432 = scalar_select %p431, %s430, 31
      %s433 = smul.addr %s432, 8
      %s434 = scalar_lea.vmem %s11, %s433
      %s435 = smul.u32 8, %s24
      %v436 = vld [vmem:[%s416] sm:$0xff]
      %v437 = vld [vmem:[%s416 + $0x8] sm:$0xff]
      %v438 = vld [vmem:[%s416 + $0x10] sm:$0xff]
      %v439 = vld [vmem:[%s416 + $0x18] sm:$0xff]
      %v440 = vld [vmem:[%s416 + $0x20] sm:$0xff]
      %v441 = vld [vmem:[%s416 + $0x28] sm:$0xff]
      %v442 = vld [vmem:[%s416 + $0x30] sm:$0xff]
      %v443 = vld [vmem:[%s416 + $0x38] sm:$0xff]
      %v444 = vld [vmem:[%s3] sm:$0xff]
      %v445 = vld [vmem:[%s3 + $0x8] sm:$0xff]
      %v446 = vld [vmem:[%s3 + $0x10] sm:$0xff]
      %v447 = vld [vmem:[%s3 + $0x18] sm:$0xff]
      %v448 = vld [vmem:[%s422] sm:$0xff]
      %v449 = vld [vmem:[%s422 + $0x8] sm:$0xff]
      %v450 = vld [vmem:[%s422 + $0x10] sm:$0xff]
      %v451 = vld [vmem:[%s422 + $0x18] sm:$0xff]
      %v452 = vld [vmem:[%s422 + $0x20] sm:$0xff]
      %v453 = vld [vmem:[%s422 + $0x28] sm:$0xff]
      %v454 = vld [vmem:[%s422 + $0x30] sm:$0xff]
      %v455 = vld [vmem:[%s422 + $0x38] sm:$0xff]
      %v456 = vld [vmem:[%s4] sm:$0xff]
      %v457 = vld [vmem:[%s4 + $0x8] sm:$0xff]
      %vm458 = vcmask 64512
      %v460 = vsel %vm458, %v448, 0
      %v463 = vsel %vm458, %v449, 0
      %v466 = vsel %vm458, %v450, 0
      %v469 = vsel %vm458, %v451, 0
      %v472 = vsel %vm458, %v452, 0
      %v475 = vsel %vm458, %v453, 0
      %v478 = vsel %vm458, %v454, 0
      %v481 = vsel %vm458, %v455, 0
      %483 = vmatprep.subr.mxu0 0.0
      %484 = vmatpush1.msra.mxu0 0.0
      %485 = vmatprep.subr.mxu0 0.0
      %486 = vmatpush1.msra.mxu0 0.0
      %487 = vmatprep.subr.mxu0 0.0
      %488 = vmatpush1.msra.mxu0 0.0
      %489 = vmatprep.subr.mxu0 0.0
      %490 = vmatpush1.msra.mxu0 0.0
      %491 = vmatprep.subr.mxu0 0.0
      %492 = vmatpush1.msra.mxu0 0.0
      %493 = vmatprep.subr.mxu0 0.0
      %494 = vmatpush1.msra.mxu0 0.0
      %495 = vmatprep.subr.mxu0 0.0
      %496 = vmatpush1.msra.mxu0 0.0
      %497 = vmatprep.subr.mxu0 0.0
      %498 = vmatpush1.msra.mxu0 0.0
      %499 = vmatprep.subr.mxu0 0.0
      %500 = vmatpush1.msra.mxu0 0.0
      %501 = vmatprep.subr.mxu0 0.0
      %502 = vmatpush1.msra.mxu0 0.0
      %503 = vmatprep.subr.mxu0 0.0
      %504 = vmatpush1.msra.mxu0 0.0
      %505 = vmatprep.subr.mxu0 0.0
      %506 = vmatpush1.msra.mxu0 0.0
      %507 = vmatprep.subr.mxu0 0.0
      %508 = vmatpush1.msra.mxu0 0.0
      %509 = vmatprep.subr.mxu0 0.0
      %510 = vmatpush1.msra.mxu0 0.0
      %511 = vmatprep.subr.mxu0 0.0
      %512 = vmatpush1.msra.mxu0 0.0
      %513 = vmatprep.subr.mxu0 %v457
      %514 = vmatpush1.msra.mxu0 %v456
      %515 = vmatprep.subr.mxu0 0.0
      %516 = vmatpush2.msra.mxu0 0.0
      %517 = vmatprep.subr.mxu0 0.0
      %518 = vmatpush2.msra.mxu0 0.0
      %519 = vmatprep.subr.mxu0 0.0
      %520 = vmatpush2.msra.mxu0 0.0
      %521 = vmatprep.subr.mxu0 0.0
      %522 = vmatpush2.msra.mxu0 0.0
      %523 = vmatprep.subr.mxu0 0.0
      %524 = vmatpush2.msra.mxu0 0.0
      %525 = vmatprep.subr.mxu0 0.0
      %526 = vmatpush2.msra.mxu0 0.0
      %527 = vmatprep.subr.mxu0 0.0
      %528 = vmatpush2.msra.mxu0 0.0
      %529 = vmatprep.subr.mxu0 0.0
      %530 = vmatpush2.msra.mxu0 0.0
      %531 = vmatprep.subr.mxu0 0.0
      %532 = vmatpush2.msra.mxu0 0.0
      %533 = vmatprep.subr.mxu0 0.0
      %534 = vmatpush2.msra.mxu0 0.0
      %535 = vmatprep.subr.mxu0 0.0
      %536 = vmatpush2.msra.mxu0 0.0
      %537 = vmatprep.subr.mxu0 0.0
      %538 = vmatpush2.msra.mxu0 0.0
      %539 = vmatprep.subr.mxu0 0.0
      %540 = vmatpush2.msra.mxu0 0.0
      %541 = vmatprep.subr.mxu0 0.0
      %542 = vmatpush2.msra.mxu0 0.0
      %543 = vmatprep.subr.mxu0 0.0
      %544 = vmatpush2.msra.mxu0 0.0
      %545 = vmatprep.subr.mxu0 0.0
      %546 = vmatpush2.msra.mxu0 0.0
      %547 = vmatprep.mubr.f32.mxu0 0.0
      %548 = vmatmul.mubr.f32.gmra.mxu0 %v460
      %v549 = vpop.f32.mrf.mxu0
      %v550 = vadd.f32 0.0, %v549
      %v551 = vpop.f32.mrf.mxu0
      %v552 = vadd.f32 0.0, %v551
      %553 = vmatprep.mubr.f32.mxu0 0.0
      %554 = vmatmul.mubr.f32.gmra.mxu0 %v463
      %v555 = vpop.f32.mrf.mxu0
      %v556 = vadd.f32 0.0, %v555
      %v557 = vpop.f32.mrf.mxu0
      %v558 = vadd.f32 0.0, %v557
      %559 = vmatprep.mubr.f32.mxu0 0.0
      %560 = vmatmul.mubr.f32.gmra.mxu0 %v466
      %v561 = vpop.f32.mrf.mxu0
      %v562 = vadd.f32 0.0, %v561
      %v563 = vpop.f32.mrf.mxu0
      %v564 = vadd.f32 0.0, %v563
      %565 = vmatprep.mubr.f32.mxu0 0.0
      %566 = vmatmul.mubr.f32.gmra.mxu0 %v469
      %v567 = vpop.f32.mrf.mxu0
      %v568 = vadd.f32 0.0, %v567
      %v569 = vpop.f32.mrf.mxu0
      %v570 = vadd.f32 0.0, %v569
      %571 = vmatprep.mubr.f32.mxu0 0.0
      %572 = vmatmul.mubr.f32.gmra.mxu0 %v472
      %v573 = vpop.f32.mrf.mxu0
      %v574 = vadd.f32 0.0, %v573
      %v575 = vpop.f32.mrf.mxu0
      %v576 = vadd.f32 0.0, %v575
      %577 = vmatprep.mubr.f32.mxu0 0.0
      %578 = vmatmul.mubr.f32.gmra.mxu0 %v475
      %v579 = vpop.f32.mrf.mxu0
      %v580 = vadd.f32 0.0, %v579
      %v581 = vpop.f32.mrf.mxu0
      %v582 = vadd.f32 0.0, %v581
      %583 = vmatprep.mubr.f32.mxu0 0.0
      %584 = vmatmul.mubr.f32.gmra.mxu0 %v478
      %v585 = vpop.f32.mrf.mxu0
      %v586 = vadd.f32 0.0, %v585
      %v587 = vpop.f32.mrf.mxu0
      %v588 = vadd.f32 0.0, %v587
      %589 = vmatprep.mubr.f32.mxu0 0.0
      %590 = vmatmul.mubr.f32.gmra.mxu0 %v481
      %v591 = vpop.f32.mrf.mxu0
      %v592 = vadd.f32 0.0, %v591
      %v593 = vpop.f32.mrf.mxu0
      %v594 = vadd.f32 0.0, %v593
      %595 = vdwg.mxu0
      %vm596 = vcmask 130048
      %v598 = vsel %vm596, %v436, 0
      %v601 = vsel %vm596, %v437, 0
      %v604 = vsel %vm596, %v438, 0
      %v607 = vsel %vm596, %v439, 0
      %v610 = vsel %vm596, %v440, 0
      %v613 = vsel %vm596, %v441, 0
      %v616 = vsel %vm596, %v442, 0
      %v619 = vsel %vm596, %v443, 0
      %621 = vmatprep.subr.mxu0 0.0
      %622 = vmatpush1.msra.mxu0 0.0
      %623 = vmatprep.subr.mxu0 0.0
      %624 = vmatpush1.msra.mxu0 0.0
      %625 = vmatprep.subr.mxu0 0.0
      %626 = vmatpush1.msra.mxu0 0.0
      %627 = vmatprep.subr.mxu0 0.0
      %628 = vmatpush1.msra.mxu0 0.0
      %629 = vmatprep.subr.mxu0 0.0
      %630 = vmatpush1.msra.mxu0 0.0
      %631 = vmatprep.subr.mxu0 0.0
      %632 = vmatpush1.msra.mxu0 0.0
      %633 = vmatprep.subr.mxu0 0.0
      %634 = vmatpush1.msra.mxu0 0.0
      %635 = vmatprep.subr.mxu0 0.0
      %636 = vmatpush1.msra.mxu0 0.0
      %637 = vmatprep.subr.mxu0 0.0
      %638 = vmatpush1.msra.mxu0 0.0
      %639 = vmatprep.subr.mxu0 0.0
      %640 = vmatpush1.msra.mxu0 0.0
      %641 = vmatprep.subr.mxu0 0.0
      %642 = vmatpush1.msra.mxu0 0.0
      %643 = vmatprep.subr.mxu0 0.0
      %644 = vmatpush1.msra.mxu0 0.0
      %645 = vmatprep.subr.mxu0 0.0
      %646 = vmatpush1.msra.mxu0 0.0
      %647 = vmatprep.subr.mxu0 0.0
      %648 = vmatpush1.msra.mxu0 0.0
      %649 = vmatprep.subr.mxu0 %v447
      %650 = vmatpush1.msra.mxu0 %v446
      %651 = vmatprep.subr.mxu0 %v445
      %652 = vmatpush1.msra.mxu0 %v444
      %653 = vmatprep.subr.mxu0 0.0
      %654 = vmatpush2.msra.mxu0 0.0
      %655 = vmatprep.subr.mxu0 0.0
      %656 = vmatpush2.msra.mxu0 0.0
      %657 = vmatprep.subr.mxu0 0.0
      %658 = vmatpush2.msra.mxu0 0.0
      %659 = vmatprep.subr.mxu0 0.0
      %660 = vmatpush2.msra.mxu0 0.0
      %661 = vmatprep.subr.mxu0 0.0
      %662 = vmatpush2.msra.mxu0 0.0
      %663 = vmatprep.subr.mxu0 0.0
      %664 = vmatpush2.msra.mxu0 0.0
      %665 = vmatprep.subr.mxu0 0.0
      %666 = vmatpush2.msra.mxu0 0.0
      %667 = vmatprep.subr.mxu0 0.0
      %668 = vmatpush2.msra.mxu0 0.0
      %669 = vmatprep.subr.mxu0 0.0
      %670 = vmatpush2.msra.mxu0 0.0
      %671 = vmatprep.subr.mxu0 0.0
      %672 = vmatpush2.msra.mxu0 0.0
      %673 = vmatprep.subr.mxu0 0.0
      %674 = vmatpush2.msra.mxu0 0.0
      %675 = vmatprep.subr.mxu0 0.0
      %676 = vmatpush2.msra.mxu0 0.0
      %677 = vmatprep.subr.mxu0 0.0
      %678 = vmatpush2.msra.mxu0 0.0
      %679 = vmatprep.subr.mxu0 0.0
      %680 = vmatpush2.msra.mxu0 0.0
      %681 = vmatprep.subr.mxu0 0.0
      %682 = vmatpush2.msra.mxu0 0.0
      %683 = vmatprep.subr.mxu0 0.0
      %684 = vmatpush2.msra.mxu0 0.0
      %685 = vmatprep.mubr.f32.mxu0 0.0
      %686 = vmatmul.mubr.f32.gmra.mxu0 %v598
      %v687 = vpop.f32.mrf.mxu0
      %v688 = vadd.f32 %v550, %v687
      %v689 = vpop.f32.mrf.mxu0
      %v690 = vadd.f32 %v552, %v689
      %691 = vmatprep.mubr.f32.mxu0 0.0
      %692 = vmatmul.mubr.f32.gmra.mxu0 %v601
      %v693 = vpop.f32.mrf.mxu0
      %v694 = vadd.f32 %v556, %v693
      %v695 = vpop.f32.mrf.mxu0
      %v696 = vadd.f32 %v558, %v695
      %697 = vmatprep.mubr.f32.mxu0 0.0
      %698 = vmatmul.mubr.f32.gmra.mxu0 %v604
      %v699 = vpop.f32.mrf.mxu0
      %v700 = vadd.f32 %v562, %v699
      %v701 = vpop.f32.mrf.mxu0
      %v702 = vadd.f32 %v564, %v701
      %703 = vmatprep.mubr.f32.mxu0 0.0
      %704 = vmatmul.mubr.f32.gmra.mxu0 %v607
      %v705 = vpop.f32.mrf.mxu0
      %v706 = vadd.f32 %v568, %v705
      %v707 = vpop.f32.mrf.mxu0
      %v708 = vadd.f32 %v570, %v707
      %709 = vmatprep.mubr.f32.mxu0 0.0
      %710 = vmatmul.mubr.f32.gmra.mxu0 %v610
      %v711 = vpop.f32.mrf.mxu0
      %v712 = vadd.f32 %v574, %v711
      %v713 = vpop.f32.mrf.mxu0
      %v714 = vadd.f32 %v576, %v713
      %715 = vmatprep.mubr.f32.mxu0 0.0
      %716 = vmatmul.mubr.f32.gmra.mxu0 %v613
      %v717 = vpop.f32.mrf.mxu0
      %v718 = vadd.f32 %v580, %v717
      %v719 = vpop.f32.mrf.mxu0
      %v720 = vadd.f32 %v582, %v719
      %721 = vmatprep.mubr.f32.mxu0 0.0
      %722 = vmatmul.mubr.f32.gmra.mxu0 %v616
      %v723 = vpop.f32.mrf.mxu0
      %v724 = vadd.f32 %v586, %v723
      %v725 = vpop.f32.mrf.mxu0
      %v726 = vadd.f32 %v588, %v725
      %727 = vmatprep.mubr.f32.mxu0 0.0
      %728 = vmatmul.mubr.f32.gmra.mxu0 %v619
      %v729 = vpop.f32.mrf.mxu0
      %v730 = vadd.f32 %v592, %v729
      %v731 = vpop.f32.mrf.mxu0
      %v732 = vadd.f32 %v594, %v731
      %733 = vdwg.mxu0
      %v734 = vld [vmem:[%s428] sm:$0xff]
      %v735 = vld [vmem:[%s428 + $0x8] sm:$0xff]
      %v736 = vld [vmem:[%s428 + $0x10] sm:$0xff]
      %v737 = vld [vmem:[%s428 + $0x18] sm:$0xff]
      %v738 = vld [vmem:[%s428 + $0x20] sm:$0xff]
      %v739 = vld [vmem:[%s428 + $0x28] sm:$0xff]
      %v740 = vld [vmem:[%s428 + $0x30] sm:$0xff]
      %v741 = vld [vmem:[%s428 + $0x38] sm:$0xff]
      %v742 = vld [vmem:[%s5] sm:$0xff]
      %v743 = vld [vmem:[%s5 + $0x8] sm:$0xff]
      %v744 = vld [vmem:[%s5 + $0x10] sm:$0xff]
      %v745 = vld [vmem:[%s5 + $0x18] sm:$0xff]
      %v747 = vsel %vm596, %v734, 0
      %v750 = vsel %vm596, %v735, 0
      %v753 = vsel %vm596, %v736, 0
      %v756 = vsel %vm596, %v737, 0
      %v759 = vsel %vm596, %v738, 0
      %v762 = vsel %vm596, %v739, 0
      %v765 = vsel %vm596, %v740, 0
      %v768 = vsel %vm596, %v741, 0
      %770 = vmatprep.subr.mxu0 0.0
      %771 = vmatpush1.msra.mxu0 0.0
      %772 = vmatprep.subr.mxu0 0.0
      %773 = vmatpush1.msra.mxu0 0.0
      %774 = vmatprep.subr.mxu0 0.0
      %775 = vmatpush1.msra.mxu0 0.0
      %776 = vmatprep.subr.mxu0 0.0
      %777 = vmatpush1.msra.mxu0 0.0
      %778 = vmatprep.subr.mxu0 0.0
      %779 = vmatpush1.msra.mxu0 0.0
      %780 = vmatprep.subr.mxu0 0.0
      %781 = vmatpush1.msra.mxu0 0.0
      %782 = vmatprep.subr.mxu0 0.0
      %783 = vmatpush1.msra.mxu0 0.0
      %784 = vmatprep.subr.mxu0 0.0
      %785 = vmatpush1.msra.mxu0 0.0
      %786 = vmatprep.subr.mxu0 0.0
      %787 = vmatpush1.msra.mxu0 0.0
      %788 = vmatprep.subr.mxu0 0.0
      %789 = vmatpush1.msra.mxu0 0.0
      %790 = vmatprep.subr.mxu0 0.0
      %791 = vmatpush1.msra.mxu0 0.0
      %792 = vmatprep.subr.mxu0 0.0
      %793 = vmatpush1.msra.mxu0 0.0
      %794 = vmatprep.subr.mxu0 0.0
      %795 = vmatpush1.msra.mxu0 0.0
      %796 = vmatprep.subr.mxu0 0.0
      %797 = vmatpush1.msra.mxu0 0.0
      %798 = vmatprep.subr.mxu0 %v745
      %799 = vmatpush1.msra.mxu0 %v744
      %800 = vmatprep.subr.mxu0 %v743
      %801 = vmatpush1.msra.mxu0 %v742
      %802 = vmatprep.subr.mxu0 0.0
      %803 = vmatpush2.msra.mxu0 0.0
      %804 = vmatprep.subr.mxu0 0.0
      %805 = vmatpush2.msra.mxu0 0.0
      %806 = vmatprep.subr.mxu0 0.0
      %807 = vmatpush2.msra.mxu0 0.0
      %808 = vmatprep.subr.mxu0 0.0
      %809 = vmatpush2.msra.mxu0 0.0
      %810 = vmatprep.subr.mxu0 0.0
      %811 = vmatpush2.msra.mxu0 0.0
      %812 = vmatprep.subr.mxu0 0.0
      %813 = vmatpush2.msra.mxu0 0.0
      %814 = vmatprep.subr.mxu0 0.0
      %815 = vmatpush2.msra.mxu0 0.0
      %816 = vmatprep.subr.mxu0 0.0
      %817 = vmatpush2.msra.mxu0 0.0
      %818 = vmatprep.subr.mxu0 0.0
      %819 = vmatpush2.msra.mxu0 0.0
      %820 = vmatprep.subr.mxu0 0.0
      %821 = vmatpush2.msra.mxu0 0.0
      %822 = vmatprep.subr.mxu0 0.0
      %823 = vmatpush2.msra.mxu0 0.0
      %824 = vmatprep.subr.mxu0 0.0
      %825 = vmatpush2.msra.mxu0 0.0
      %826 = vmatprep.subr.mxu0 0.0
      %827 = vmatpush2.msra.mxu0 0.0
      %828 = vmatprep.subr.mxu0 0.0
      %829 = vmatpush2.msra.mxu0 0.0
      %830 = vmatprep.subr.mxu0 0.0
      %831 = vmatpush2.msra.mxu0 0.0
      %832 = vmatprep.subr.mxu0 0.0
      %833 = vmatpush2.msra.mxu0 0.0
      %834 = vmatprep.mubr.f32.mxu0 0.0
      %835 = vmatmul.mubr.f32.gmra.mxu0 %v747
      %v836 = vpop.f32.mrf.mxu0
      %v837 = vadd.f32 0.0, %v836
      %v838 = vpop.f32.mrf.mxu0
      %v839 = vadd.f32 0.0, %v838
      %840 = vmatprep.mubr.f32.mxu0 0.0
      %841 = vmatmul.mubr.f32.gmra.mxu0 %v750
      %v842 = vpop.f32.mrf.mxu0
      %v843 = vadd.f32 0.0, %v842
      %v844 = vpop.f32.mrf.mxu0
      %v845 = vadd.f32 0.0, %v844
      %846 = vmatprep.mubr.f32.mxu0 0.0
      %847 = vmatmul.mubr.f32.gmra.mxu0 %v753
      %v848 = vpop.f32.mrf.mxu0
      %v849 = vadd.f32 0.0, %v848
      %v850 = vpop.f32.mrf.mxu0
      %v851 = vadd.f32 0.0, %v850
      %852 = vmatprep.mubr.f32.mxu0 0.0
      %853 = vmatmul.mubr.f32.gmra.mxu0 %v756
      %v854 = vpop.f32.mrf.mxu0
      %v855 = vadd.f32 0.0, %v854
      %v856 = vpop.f32.mrf.mxu0
      %v857 = vadd.f32 0.0, %v856
      %858 = vmatprep.mubr.f32.mxu0 0.0
      %859 = vmatmul.mubr.f32.gmra.mxu0 %v759
      %v860 = vpop.f32.mrf.mxu0
      %v861 = vadd.f32 0.0, %v860
      %v862 = vpop.f32.mrf.mxu0
      %v863 = vadd.f32 0.0, %v862
      %864 = vmatprep.mubr.f32.mxu0 0.0
      %865 = vmatmul.mubr.f32.gmra.mxu0 %v762
      %v866 = vpop.f32.mrf.mxu0
      %v867 = vadd.f32 0.0, %v866
      %v868 = vpop.f32.mrf.mxu0
      %v869 = vadd.f32 0.0, %v868
      %870 = vmatprep.mubr.f32.mxu0 0.0
      %871 = vmatmul.mubr.f32.gmra.mxu0 %v765
      %v872 = vpop.f32.mrf.mxu0
      %v873 = vadd.f32 0.0, %v872
      %v874 = vpop.f32.mrf.mxu0
      %v875 = vadd.f32 0.0, %v874
      %876 = vmatprep.mubr.f32.mxu0 0.0
      %877 = vmatmul.mubr.f32.gmra.mxu0 %v768
      %v878 = vpop.f32.mrf.mxu0
      %v879 = vadd.f32 0.0, %v878
      %v880 = vpop.f32.mrf.mxu0
      %v881 = vadd.f32 0.0, %v880
      %882 = vdwg.mxu0
      %v883 = vadd.f32 %v688, %v837
      %v884 = vadd.f32 %v690, %v839
      %v885 = vadd.f32 %v694, %v843
      %v886 = vadd.f32 %v696, %v845
      %v887 = vadd.f32 %v700, %v849
      %v888 = vadd.f32 %v702, %v851
      %v889 = vadd.f32 %v706, %v855
      %v890 = vadd.f32 %v708, %v857
      %v891 = vadd.f32 %v712, %v861
      %v892 = vadd.f32 %v714, %v863
      %v893 = vadd.f32 %v718, %v867
      %v894 = vadd.f32 %v720, %v869
      %v895 = vadd.f32 %v724, %v873
      %v896 = vadd.f32 %v726, %v875
      %v897 = vadd.f32 %v730, %v879
      %v898 = vadd.f32 %v732, %v881
      %v899 = vld [vmem:[%s6] sm:$0x3]
      %v901 = vlaneseq
      %v902 = vshrl.u32 %v901, 7
      %v903 = vsub.s32 0, %v902
      %v904 = vrot.slane %v899, %v903
      %v905 = vlaneseq
      %v906 = vshrl.u32 %v905, 7
      %v907 = vsub.s32 1, %v906
      %v908 = vrot.slane %v899, %v907
      %v911 = vadd.f32 %v883, %v904
      %v912 = vadd.f32 %v884, %v908
      %v913 = vadd.f32 %v885, %v904
      %v914 = vadd.f32 %v886, %v908
      %v915 = vadd.f32 %v887, %v904
      %v916 = vadd.f32 %v888, %v908
      %v917 = vadd.f32 %v889, %v904
      %v918 = vadd.f32 %v890, %v908
      %v919 = vadd.f32 %v891, %v904
      %v920 = vadd.f32 %v892, %v908
      %v921 = vadd.f32 %v893, %v904
      %v922 = vadd.f32 %v894, %v908
      %v923 = vadd.f32 %v895, %v904
      %v924 = vadd.f32 %v896, %v908
      %v925 = vadd.f32 %v897, %v904
      %v926 = vadd.f32 %v898, %v908
      %v927 = vmax.f32 %v911, 0.0
      %v928 = vmax.f32 %v912, 0.0
      %v929 = vmax.f32 %v913, 0.0
      %v930 = vmax.f32 %v914, 0.0
      %v931 = vmax.f32 %v915, 0.0
      %v932 = vmax.f32 %v916, 0.0
      %v933 = vmax.f32 %v917, 0.0
      %v934 = vmax.f32 %v918, 0.0
      %v935 = vmax.f32 %v919, 0.0
      %v936 = vmax.f32 %v920, 0.0
      %v937 = vmax.f32 %v921, 0.0
      %v938 = vmax.f32 %v922, 0.0
      %v939 = vmax.f32 %v923, 0.0
      %v940 = vmax.f32 %v924, 0.0
      %v941 = vmax.f32 %v925, 0.0
      %v942 = vmax.f32 %v926, 0.0
      %v943 = vld [vmem:[%s7] sm:$0xff]
      %v944 = vld [vmem:[%s7 + $0x8] sm:$0xff]
      %v945 = vld [vmem:[%s7 + $0x10] sm:$0xff]
      %v946 = vld [vmem:[%s7 + $0x18] sm:$0xff]
      %v947 = vld [vmem:[%s7 + $0x20] sm:$0xff]
      %v948 = vld [vmem:[%s7 + $0x28] sm:$0xff]
      %v949 = vld [vmem:[%s7 + $0x30] sm:$0xff]
      %v950 = vld [vmem:[%s7 + $0x38] sm:$0xff]
      %v951 = vld [vmem:[%s7 + $0x40] sm:$0xff]
      %v952 = vld [vmem:[%s7 + $0x48] sm:$0xff]
      %v953 = vld [vmem:[%s7 + $0x50] sm:$0xff]
      %v954 = vld [vmem:[%s7 + $0x58] sm:$0xff]
      %v955 = vld [vmem:[%s7 + $0x60] sm:$0xff]
      %v956 = vld [vmem:[%s7 + $0x68] sm:$0xff]
      %v957 = vld [vmem:[%s7 + $0x70] sm:$0xff]
      %v958 = vld [vmem:[%s7 + $0x78] sm:$0xff]
      %v959 = vld [vmem:[%s7 + $0x80] sm:$0xff]
      %v960 = vld [vmem:[%s7 + $0x88] sm:$0xff]
      %v961 = vld [vmem:[%s7 + $0x90] sm:$0xff]
      %v962 = vld [vmem:[%s7 + $0x98] sm:$0xff]
      %v963 = vld [vmem:[%s7 + $0xa0] sm:$0xff]
      %v964 = vld [vmem:[%s7 + $0xa8] sm:$0xff]
      %v965 = vld [vmem:[%s7 + $0xb0] sm:$0xff]
      %v966 = vld [vmem:[%s7 + $0xb8] sm:$0xff]
      %v967 = vld [vmem:[%s7 + $0xc0] sm:$0xff]
      %v968 = vld [vmem:[%s7 + $0xc8] sm:$0xff]
      %v969 = vld [vmem:[%s7 + $0xd0] sm:$0xff]
      %v970 = vld [vmem:[%s7 + $0xd8] sm:$0xff]
      %v971 = vld [vmem:[%s7 + $0xe0] sm:$0xff]
      %v972 = vld [vmem:[%s7 + $0xe8] sm:$0xff]
      %v973 = vld [vmem:[%s7 + $0xf0] sm:$0xff]
      %v974 = vld [vmem:[%s7 + $0xf8] sm:$0xff]
      %v975 = vld [vmem:[%s7 + $0x100] sm:$0xff]
      %v976 = vld [vmem:[%s7 + $0x108] sm:$0xff]
      %v977 = vld [vmem:[%s7 + $0x110] sm:$0xff]
      %v978 = vld [vmem:[%s7 + $0x118] sm:$0xff]
      %v979 = vld [vmem:[%s7 + $0x120] sm:$0xff]
      %v980 = vld [vmem:[%s7 + $0x128] sm:$0xff]
      %v981 = vld [vmem:[%s7 + $0x130] sm:$0xff]
      %v982 = vld [vmem:[%s7 + $0x138] sm:$0xff]
      %v983 = vld [vmem:[%s7 + $0x140] sm:$0xff]
      %v984 = vld [vmem:[%s7 + $0x148] sm:$0xff]
      %v985 = vld [vmem:[%s7 + $0x150] sm:$0xff]
      %v986 = vld [vmem:[%s7 + $0x158] sm:$0xff]
      %v987 = vld [vmem:[%s7 + $0x160] sm:$0xff]
      %v988 = vld [vmem:[%s7 + $0x168] sm:$0xff]
      %v989 = vld [vmem:[%s7 + $0x170] sm:$0xff]
      %v990 = vld [vmem:[%s7 + $0x178] sm:$0xff]
      %v991 = vld [vmem:[%s7 + $0x180] sm:$0xff]
      %v992 = vld [vmem:[%s7 + $0x188] sm:$0xff]
      %v993 = vld [vmem:[%s7 + $0x190] sm:$0xff]
      %v994 = vld [vmem:[%s7 + $0x198] sm:$0xff]
      %v995 = vld [vmem:[%s7 + $0x1a0] sm:$0xff]
      %v996 = vld [vmem:[%s7 + $0x1a8] sm:$0xff]
      %v997 = vld [vmem:[%s7 + $0x1b0] sm:$0xff]
      %v998 = vld [vmem:[%s7 + $0x1b8] sm:$0xff]
      %v999 = vld [vmem:[%s7 + $0x1c0] sm:$0xff]
      %v1000 = vld [vmem:[%s7 + $0x1c8] sm:$0xff]
      %v1001 = vld [vmem:[%s7 + $0x1d0] sm:$0xff]
      %v1002 = vld [vmem:[%s7 + $0x1d8] sm:$0xff]
      %v1003 = vld [vmem:[%s7 + $0x1e0] sm:$0xff]
      %v1004 = vld [vmem:[%s7 + $0x1e8] sm:$0xff]
      %v1005 = vld [vmem:[%s7 + $0x1f0] sm:$0xff]
      %v1006 = vld [vmem:[%s7 + $0x1f8] sm:$0xff]
      %v1007 = vld [vmem:[%s8] sm:$0x3]
      %v1009 = vlaneseq
      %v1010 = vshrl.u32 %v1009, 7
      %v1011 = vsub.s32 0, %v1010
      %v1012 = vrot.slane %v1007, %v1011
      %v1013 = vlaneseq
      %v1014 = vshrl.u32 %v1013, 7
      %v1015 = vsub.s32 1, %v1014
      %v1016 = vrot.slane %v1007, %v1015
      %1019 = vmatprep.subr.mxu0 %v974
      %1020 = vmatpush1.msra.mxu0 %v973
      %1021 = vmatprep.subr.mxu0 %v972
      %1022 = vmatpush1.msra.mxu0 %v971
      %1023 = vmatprep.subr.mxu0 %v970
      %1024 = vmatpush1.msra.mxu0 %v969
      %1025 = vmatprep.subr.mxu0 %v968
      %1026 = vmatpush1.msra.mxu0 %v967
      %1027 = vmatprep.subr.mxu0 %v966
      %1028 = vmatpush1.msra.mxu0 %v965
      %1029 = vmatprep.subr.mxu0 %v964
      %1030 = vmatpush1.msra.mxu0 %v963
      %1031 = vmatprep.subr.mxu0 %v962
      %1032 = vmatpush1.msra.mxu0 %v961
      %1033 = vmatprep.subr.mxu0 %v960
      %1034 = vmatpush1.msra.mxu0 %v959
      %1035 = vmatprep.subr.mxu0 %v958
      %1036 = vmatpush1.msra.mxu0 %v957
      %1037 = vmatprep.subr.mxu0 %v956
      %1038 = vmatpush1.msra.mxu0 %v955
      %1039 = vmatprep.subr.mxu0 %v954
      %1040 = vmatpush1.msra.mxu0 %v953
      %1041 = vmatprep.subr.mxu0 %v952
      %1042 = vmatpush1.msra.mxu0 %v951
      %1043 = vmatprep.subr.mxu0 %v950
      %1044 = vmatpush1.msra.mxu0 %v949
      %1045 = vmatprep.subr.mxu0 %v948
      %1046 = vmatpush1.msra.mxu0 %v947
      %1047 = vmatprep.subr.mxu0 %v946
      %1048 = vmatpush1.msra.mxu0 %v945
      %1049 = vmatprep.subr.mxu0 %v944
      %1050 = vmatpush1.msra.mxu0 %v943
      %1051 = vmatprep.subr.mxu0 %v1006
      %1052 = vmatpush2.msra.mxu0 %v1005
      %1053 = vmatprep.subr.mxu0 %v1004
      %1054 = vmatpush2.msra.mxu0 %v1003
      %1055 = vmatprep.subr.mxu0 %v1002
      %1056 = vmatpush2.msra.mxu0 %v1001
      %1057 = vmatprep.subr.mxu0 %v1000
      %1058 = vmatpush2.msra.mxu0 %v999
      %1059 = vmatprep.subr.mxu0 %v998
      %1060 = vmatpush2.msra.mxu0 %v997
      %1061 = vmatprep.subr.mxu0 %v996
      %1062 = vmatpush2.msra.mxu0 %v995
      %1063 = vmatprep.subr.mxu0 %v994
      %1064 = vmatpush2.msra.mxu0 %v993
      %1065 = vmatprep.subr.mxu0 %v992
      %1066 = vmatpush2.msra.mxu0 %v991
      %1067 = vmatprep.subr.mxu0 %v990
      %1068 = vmatpush2.msra.mxu0 %v989
      %1069 = vmatprep.subr.mxu0 %v988
      %1070 = vmatpush2.msra.mxu0 %v987
      %1071 = vmatprep.subr.mxu0 %v986
      %1072 = vmatpush2.msra.mxu0 %v985
      %1073 = vmatprep.subr.mxu0 %v984
      %1074 = vmatpush2.msra.mxu0 %v983
      %1075 = vmatprep.subr.mxu0 %v982
      %1076 = vmatpush2.msra.mxu0 %v981
      %1077 = vmatprep.subr.mxu0 %v980
      %1078 = vmatpush2.msra.mxu0 %v979
      %1079 = vmatprep.subr.mxu0 %v978
      %1080 = vmatpush2.msra.mxu0 %v977
      %1081 = vmatprep.subr.mxu0 %v976
      %1082 = vmatpush2.msra.mxu0 %v975
      %1083 = vmatprep.mubr.f32.mxu0 %v928
      %1084 = vmatmul.mubr.f32.gmra.mxu0 %v927
      %v1085 = vpop.f32.mrf.mxu0
      %v1086 = vadd.f32 %v1012, %v1085
      %v1087 = vpop.f32.mrf.mxu0
      %v1088 = vadd.f32 %v1016, %v1087
      %1089 = vmatprep.mubr.f32.mxu0 %v930
      %1090 = vmatmul.mubr.f32.gmra.mxu0 %v929
      %v1091 = vpop.f32.mrf.mxu0
      %v1092 = vadd.f32 %v1012, %v1091
      %v1093 = vpop.f32.mrf.mxu0
      %v1094 = vadd.f32 %v1016, %v1093
      %1095 = vmatprep.mubr.f32.mxu0 %v932
      %1096 = vmatmul.mubr.f32.gmra.mxu0 %v931
      %v1097 = vpop.f32.mrf.mxu0
      %v1098 = vadd.f32 %v1012, %v1097
      %v1099 = vpop.f32.mrf.mxu0
      %v1100 = vadd.f32 %v1016, %v1099
      %1101 = vmatprep.mubr.f32.mxu0 %v934
      %1102 = vmatmul.mubr.f32.gmra.mxu0 %v933
      %v1103 = vpop.f32.mrf.mxu0
      %v1104 = vadd.f32 %v1012, %v1103
      %v1105 = vpop.f32.mrf.mxu0
      %v1106 = vadd.f32 %v1016, %v1105
      %1107 = vmatprep.mubr.f32.mxu0 %v936
      %1108 = vmatmul.mubr.f32.gmra.mxu0 %v935
      %v1109 = vpop.f32.mrf.mxu0
      %v1110 = vadd.f32 %v1012, %v1109
      %v1111 = vpop.f32.mrf.mxu0
      %v1112 = vadd.f32 %v1016, %v1111
      %1113 = vmatprep.mubr.f32.mxu0 %v938
      %1114 = vmatmul.mubr.f32.gmra.mxu0 %v937
      %v1115 = vpop.f32.mrf.mxu0
      %v1116 = vadd.f32 %v1012, %v1115
      %v1117 = vpop.f32.mrf.mxu0
      %v1118 = vadd.f32 %v1016, %v1117
      %1119 = vmatprep.mubr.f32.mxu0 %v940
      %1120 = vmatmul.mubr.f32.gmra.mxu0 %v939
      %v1121 = vpop.f32.mrf.mxu0
      %v1122 = vadd.f32 %v1012, %v1121
      %v1123 = vpop.f32.mrf.mxu0
      %v1124 = vadd.f32 %v1016, %v1123
      %1125 = vmatprep.mubr.f32.mxu0 %v942
      %1126 = vmatmul.mubr.f32.gmra.mxu0 %v941
      %v1127 = vpop.f32.mrf.mxu0
      %v1128 = vadd.f32 %v1012, %v1127
      %v1129 = vpop.f32.mrf.mxu0
      %v1130 = vadd.f32 %v1016, %v1129
      %1131 = vdwg.mxu0
      %v1132 = vmax.f32 %v1086, 0.0
      %v1133 = vmax.f32 %v1088, 0.0
      %v1134 = vmax.f32 %v1092, 0.0
      %v1135 = vmax.f32 %v1094, 0.0
      %v1136 = vmax.f32 %v1098, 0.0
      %v1137 = vmax.f32 %v1100, 0.0
      %v1138 = vmax.f32 %v1104, 0.0
      %v1139 = vmax.f32 %v1106, 0.0
      %v1140 = vmax.f32 %v1110, 0.0
      %v1141 = vmax.f32 %v1112, 0.0
      %v1142 = vmax.f32 %v1116, 0.0
      %v1143 = vmax.f32 %v1118, 0.0
      %v1144 = vmax.f32 %v1122, 0.0
      %v1145 = vmax.f32 %v1124, 0.0
      %v1146 = vmax.f32 %v1128, 0.0
      %v1147 = vmax.f32 %v1130, 0.0
      %v1148 = vld [vmem:[%s9] sm:$0xff]
      %v1149 = vld [vmem:[%s9 + $0x8] sm:$0xff]
      %v1150 = vld [vmem:[%s9 + $0x10] sm:$0xff]
      %v1151 = vld [vmem:[%s9 + $0x18] sm:$0xff]
      %v1152 = vld [vmem:[%s9 + $0x20] sm:$0xff]
      %v1153 = vld [vmem:[%s9 + $0x28] sm:$0xff]
      %v1154 = vld [vmem:[%s9 + $0x30] sm:$0xff]
      %v1155 = vld [vmem:[%s9 + $0x38] sm:$0xff]
      %v1156 = vld [vmem:[%s9 + $0x40] sm:$0xff]
      %v1157 = vld [vmem:[%s9 + $0x48] sm:$0xff]
      %v1158 = vld [vmem:[%s9 + $0x50] sm:$0xff]
      %v1159 = vld [vmem:[%s9 + $0x58] sm:$0xff]
      %v1160 = vld [vmem:[%s9 + $0x60] sm:$0xff]
      %v1161 = vld [vmem:[%s9 + $0x68] sm:$0xff]
      %v1162 = vld [vmem:[%s9 + $0x70] sm:$0xff]
      %v1163 = vld [vmem:[%s9 + $0x78] sm:$0xff]
      %v1164 = vld [vmem:[%s9 + $0x80] sm:$0xff]
      %v1165 = vld [vmem:[%s9 + $0x88] sm:$0xff]
      %v1166 = vld [vmem:[%s9 + $0x90] sm:$0xff]
      %v1167 = vld [vmem:[%s9 + $0x98] sm:$0xff]
      %v1168 = vld [vmem:[%s9 + $0xa0] sm:$0xff]
      %v1169 = vld [vmem:[%s9 + $0xa8] sm:$0xff]
      %v1170 = vld [vmem:[%s9 + $0xb0] sm:$0xff]
      %v1171 = vld [vmem:[%s9 + $0xb8] sm:$0xff]
      %v1172 = vld [vmem:[%s9 + $0xc0] sm:$0xff]
      %v1173 = vld [vmem:[%s9 + $0xc8] sm:$0xff]
      %v1174 = vld [vmem:[%s9 + $0xd0] sm:$0xff]
      %v1175 = vld [vmem:[%s9 + $0xd8] sm:$0xff]
      %v1176 = vld [vmem:[%s9 + $0xe0] sm:$0xff]
      %v1177 = vld [vmem:[%s9 + $0xe8] sm:$0xff]
      %v1178 = vld [vmem:[%s9 + $0xf0] sm:$0xff]
      %v1179 = vld [vmem:[%s9 + $0xf8] sm:$0xff]
      %v1180 = vld [vmem:[#allocation2] sm:$0x1]
      %v1182 = vlaneseq
      %v1183 = vshrl.u32 %v1182, 7
      %v1184 = vsub.s32 0, %v1183
      %v1185 = vrot.slane %v1180, %v1184
      %1187 = vmatprep.subr.mxu0 0.0
      %1188 = vmatpush1.msra.mxu0 %v1163
      %1189 = vmatprep.subr.mxu0 0.0
      %1190 = vmatpush1.msra.mxu0 %v1162
      %1191 = vmatprep.subr.mxu0 0.0
      %1192 = vmatpush1.msra.mxu0 %v1161
      %1193 = vmatprep.subr.mxu0 0.0
      %1194 = vmatpush1.msra.mxu0 %v1160
      %1195 = vmatprep.subr.mxu0 0.0
      %1196 = vmatpush1.msra.mxu0 %v1159
      %1197 = vmatprep.subr.mxu0 0.0
      %1198 = vmatpush1.msra.mxu0 %v1158
      %1199 = vmatprep.subr.mxu0 0.0
      %1200 = vmatpush1.msra.mxu0 %v1157
      %1201 = vmatprep.subr.mxu0 0.0
      %1202 = vmatpush1.msra.mxu0 %v1156
      %1203 = vmatprep.subr.mxu0 0.0
      %1204 = vmatpush1.msra.mxu0 %v1155
      %1205 = vmatprep.subr.mxu0 0.0
      %1206 = vmatpush1.msra.mxu0 %v1154
      %1207 = vmatprep.subr.mxu0 0.0
      %1208 = vmatpush1.msra.mxu0 %v1153
      %1209 = vmatprep.subr.mxu0 0.0
      %1210 = vmatpush1.msra.mxu0 %v1152
      %1211 = vmatprep.subr.mxu0 0.0
      %1212 = vmatpush1.msra.mxu0 %v1151
      %1213 = vmatprep.subr.mxu0 0.0
      %1214 = vmatpush1.msra.mxu0 %v1150
      %1215 = vmatprep.subr.mxu0 0.0
      %1216 = vmatpush1.msra.mxu0 %v1149
      %1217 = vmatprep.subr.mxu0 0.0
      %1218 = vmatpush1.msra.mxu0 %v1148
      %1219 = vmatprep.subr.mxu0 0.0
      %1220 = vmatpush2.msra.mxu0 %v1179
      %1221 = vmatprep.subr.mxu0 0.0
      %1222 = vmatpush2.msra.mxu0 %v1178
      %1223 = vmatprep.subr.mxu0 0.0
      %1224 = vmatpush2.msra.mxu0 %v1177
      %1225 = vmatprep.subr.mxu0 0.0
      %1226 = vmatpush2.msra.mxu0 %v1176
      %1227 = vmatprep.subr.mxu0 0.0
      %1228 = vmatpush2.msra.mxu0 %v1175
      %1229 = vmatprep.subr.mxu0 0.0
      %1230 = vmatpush2.msra.mxu0 %v1174
      %1231 = vmatprep.subr.mxu0 0.0
      %1232 = vmatpush2.msra.mxu0 %v1173
      %1233 = vmatprep.subr.mxu0 0.0
      %1234 = vmatpush2.msra.mxu0 %v1172
      %1235 = vmatprep.subr.mxu0 0.0
      %1236 = vmatpush2.msra.mxu0 %v1171
      %1237 = vmatprep.subr.mxu0 0.0
      %1238 = vmatpush2.msra.mxu0 %v1170
      %1239 = vmatprep.subr.mxu0 0.0
      %1240 = vmatpush2.msra.mxu0 %v1169
      %1241 = vmatprep.subr.mxu0 0.0
      %1242 = vmatpush2.msra.mxu0 %v1168
      %1243 = vmatprep.subr.mxu0 0.0
      %1244 = vmatpush2.msra.mxu0 %v1167
      %1245 = vmatprep.subr.mxu0 0.0
      %1246 = vmatpush2.msra.mxu0 %v1166
      %1247 = vmatprep.subr.mxu0 0.0
      %1248 = vmatpush2.msra.mxu0 %v1165
      %1249 = vmatprep.subr.mxu0 0.0
      %1250 = vmatpush2.msra.mxu0 %v1164
      %1251 = vmatprep.mubr.f32.mxu0 %v1133
      %1252 = vmatmul.mubr.f32.gmra.mxu0 %v1132
      %v1253 = vpop.f32.mrf.mxu0
      %v1254 = vadd.f32 %v1185, %v1253
      %v1255 = vpop.f32.mrf.mxu0
      %1256 = vmatprep.mubr.f32.mxu0 %v1135
      %1257 = vmatmul.mubr.f32.gmra.mxu0 %v1134
      %v1258 = vpop.f32.mrf.mxu0
      %v1259 = vadd.f32 %v1185, %v1258
      %v1260 = vpop.f32.mrf.mxu0
      %1261 = vmatprep.mubr.f32.mxu0 %v1137
      %1262 = vmatmul.mubr.f32.gmra.mxu0 %v1136
      %v1263 = vpop.f32.mrf.mxu0
      %v1264 = vadd.f32 %v1185, %v1263
      %v1265 = vpop.f32.mrf.mxu0
      %1266 = vmatprep.mubr.f32.mxu0 %v1139
      %1267 = vmatmul.mubr.f32.gmra.mxu0 %v1138
      %v1268 = vpop.f32.mrf.mxu0
      %v1269 = vadd.f32 %v1185, %v1268
      %v1270 = vpop.f32.mrf.mxu0
      %1271 = vmatprep.mubr.f32.mxu0 %v1141
      %1272 = vmatmul.mubr.f32.gmra.mxu0 %v1140
      %v1273 = vpop.f32.mrf.mxu0
      %v1274 = vadd.f32 %v1185, %v1273
      %v1275 = vpop.f32.mrf.mxu0
      %1276 = vmatprep.mubr.f32.mxu0 %v1143
      %1277 = vmatmul.mubr.f32.gmra.mxu0 %v1142
      %v1278 = vpop.f32.mrf.mxu0
      %v1279 = vadd.f32 %v1185, %v1278
      %v1280 = vpop.f32.mrf.mxu0
      %1281 = vmatprep.mubr.f32.mxu0 %v1145
      %1282 = vmatmul.mubr.f32.gmra.mxu0 %v1144
      %v1283 = vpop.f32.mrf.mxu0
      %v1284 = vadd.f32 %v1185, %v1283
      %v1285 = vpop.f32.mrf.mxu0
      %1286 = vmatprep.mubr.f32.mxu0 %v1147
      %1287 = vmatmul.mubr.f32.gmra.mxu0 %v1146
      %v1288 = vpop.f32.mrf.mxu0
      %v1289 = vadd.f32 %v1185, %v1288
      %v1290 = vpop.f32.mrf.mxu0
      %1291 = vdwg.mxu0
      %vm1292 = vcmask 7168
      %1293 = vst.msk [vmem:[%s434] sm:$0xff] %vm1292, %v1254
      %1294 = vst.msk [vmem:[%s434 + $0x8] sm:$0xff] %vm1292, %v1259
      %1295 = vst.msk [vmem:[%s434 + $0x10] sm:$0xff] %vm1292, %v1264
      %1296 = vst.msk [vmem:[%s434 + $0x18] sm:$0xff] %vm1292, %v1269
      %1297 = vst.msk [vmem:[%s434 + $0x20] sm:$0xff] %vm1292, %v1274
      %1298 = vst.msk [vmem:[%s434 + $0x28] sm:$0xff] %vm1292, %v1279
      %1299 = vst.msk [vmem:[%s434 + $0x30] sm:$0xff] %vm1292, %v1284
      %1300 = vst.msk [vmem:[%s434 + $0x38] sm:$0xff] %vm1292, %v1289
      %s1301 = smul.u32 8, %s24
      %p1302 = scmp.lt.s32.totalorder %s1301, 31
      %s1303 = scalar_select %p1302, %s1301, 31
      %s1304 = smul.addr %s1303, 8
      %s1305 = scalar_lea.vmem %s11, %s1304
      // Predicated region
      $region65: #{tpu_custom_call.1} parent=63 // pred_check
        %p1306 = pneg %p288
      $region66: #{tpu_custom_call.1} parent=63 // pred_check_branch
        %1308 = sbr.rel (%p1306) target = $region68
      $region67: #{tpu_custom_call.1} parent=63 // pred_region
        %s1309 = smul.u32 8, %s24
      $region68: #{tpu_custom_call.1} parent=63 // pred_fallthru
        _
    $region64: #{tpu_custom_call.1} parent=5 // pred_fallthru
      _
    %p1310 = scmp.le.s32.totalorder 2, %s19
    // Predicated region
    $region69: #{tpu_custom_call.1} parent=5 // pred_check
      %p1311 = pneg %p1310
    $region70: #{tpu_custom_call.1} parent=5 // pred_check_branch
      %1313 = sbr.rel (%p1311) target = $region72
    $region71: #{tpu_custom_call.1} parent=5 // pred_region
      %s1314 = ssub.s32 %s19, 2
      // Predicated region
      $region73: #{tpu_custom_call.1} parent=71 // pred_check
        %p1315 = pneg %p294
      $region74: #{tpu_custom_call.1} parent=71 // pred_check_branch
        %1317 = sbr.rel (%p1315) target = $region76
      $region75: #{tpu_custom_call.1} parent=71 // pred_region
        %s1318 = smul.u32 8, %s25
        %p1319 = scmp.lt.s32.totalorder %s1318, 31
        %s1320 = scalar_select %p1319, %s1318, 31
        %s1321 = smul.addr %s1320, 8
        %s1322 = scalar_lea.vmem %s11, %s1321
      $region76: #{tpu_custom_call.1} parent=71 // pred_fallthru
        _
    $region72: #{tpu_custom_call.1} parent=5 // pred_fallthru
      _
  $region6: #{tpu_custom_call.1} parent=0 // loop_footer
    %s23 = sadd.s32 1, %s19
  $region7: #{tpu_custom_call.1} parent=0 // loop_footer_branch
    %18 = sbr.rel target = $region3
  $region8: #{tpu_custom_call.1} parent=0 // loop_exit
    _

</llo_original>
